<compile_context>
chip_gen: v6e
topology: v6e:2x2x1
jax: 0.10.0
libtpu: 0.0.40
codegen_flags: <defaults>
</compile_context>

<pallas_src>
import functools

import jax
import jax.numpy as jnp
from jax.experimental import pallas as pl
from jax.experimental.pallas import tpu as pltpu

LANES = 128                # lane width of a vreg
DEFAULT_BLOCK_ROWS = 2048  # rows per grid step (1 MiB f32 per input per buffer)


def _detect_num_slices():
    """2 slices (both TensorCores) on v7x-class chips, 1 elsewhere."""
    try:
        kind = jax.devices()[0].device_kind.lower()
    except Exception:
        return 1
    if "v7" in kind or "7x" in kind:
        return 2
    return 1


def _boundary_loss_kernel(x_ref, t_ref, acc_ref, *, block_rows, fold_rows,
                          num_blocks, blocks_per_slice, valid_rows_last,
                          needs_skip_guard):
    """Accumulates per-lane partial sums into acc_ref (shape (4, fold_rows, LANES)):
       slab 0: count(target == 1)
       slab 1: count(target == 0)
       slab 2: sum of unweighted BCE over positive elements
       slab 3: sum of unweighted BCE over negative elements
    """
    i = pl.program_id(1)

    @pl.when(i == 0)
    def _init():
        acc_ref[...] = jnp.zeros_like(acc_ref)

    # Global block index this grid step is responsible for. If it is past the
    # end (only possible when the slice axis over-covers the block count), the
    # index_map clamped the DMA to a valid block and we simply skip it.
    intended_block = pl.program_id(0) * blocks_per_slice + i

    def accumulate(row_mask):
        x = x_ref[...].astype(jnp.float32)
        t = t_ref[...].astype(jnp.float32)

        pos = t == 1.0
        neg = t == 0.0
        if row_mask is not None:
            pos = jnp.logical_and(row_mask, pos)
            neg = jnp.logical_and(row_mask, neg)

        # Numerically stable BCE-with-logits (same form PyTorch uses):
        #   max(x, 0) - x * t + log(1 + exp(-|x|))
        bce = jnp.maximum(x, 0.0) - x * t + jnp.log1p(jnp.exp(-jnp.abs(x)))

        def fold(v):
            # Reduce (block_rows, LANES) -> (fold_rows, LANES) with vreg-aligned
            # adds only (no sublane shuffles) when block_rows % 8 == 0.
            if fold_rows == 8:
                return jnp.sum(v.reshape(block_rows // 8, 8, LANES), axis=0)
            return jnp.sum(v, axis=0, keepdims=True)

        # jnp.where (not multiply) so garbage/NaN bce in masked rows is dropped.
        acc_ref[0, :, :] += fold(pos.astype(jnp.float32))
        acc_ref[1, :, :] += fold(neg.astype(jnp.float32))
        acc_ref[2, :, :] += fold(jnp.where(pos, bce, 0.0))
        acc_ref[3, :, :] += fold(jnp.where(neg, bce, 0.0))

    partial_last = valid_rows_last != block_rows  # static

    if partial_last:
        # Fast path: every block except the last one, no masking at all.
        @pl.when(intended_block < num_blocks - 1)
        def _full_blocks():
            accumulate(None)

        # Masked path: only the single partial last block. The valid-row count
        # is static, so the mask is a compare against a constant iota.
        @pl.when(intended_block == num_blocks - 1)
        def _last_block():
            row = jax.lax.broadcasted_iota(jnp.int32, (block_rows, LANES), 0)
            accumulate(row < valid_rows_last)
    elif needs_skip_guard:
        @pl.when(intended_block < num_blocks)
        def _guarded_blocks():
            accumulate(None)
    else:
        accumulate(None)


@functools.partial(jax.jit,
                   static_argnames=("coeff_bce", "block_rows_cap", "num_slices"))
def boundary_loss(bd_pre, bd_gt, coeff_bce=20.0,
                  block_rows_cap=DEFAULT_BLOCK_ROWS, num_slices=None):
    """JAX/Pallas equivalent of BondaryLoss.forward(bd_pre, bd_gt)."""
    if num_slices is None:
        num_slices = _detect_num_slices()

    n, c, h, w = bd_pre.shape

    # permute(0,2,3,1) is a pure relabelling when c == 1 (the boundary head):
    # skip it so XLA cannot emit a transpose copy in HBM.
    if c == 1:
        logits = bd_pre.reshape(-1)
    else:
        logits = jnp.transpose(bd_pre, (0, 2, 3, 1)).reshape(-1)
    target = bd_gt.reshape(-1)
    if logits.shape[0] != target.shape[0]:
        # The PyTorch original only supports c == 1 (bd_gt has no channel dim).
        raise ValueError("bd_pre and bd_gt must contain the same number of "
                         "elements (BondaryLoss expects c == 1).")

    num_elems = logits.shape[0]  # mean is over ALL elements (PyTorch semantics)
    rows_full = num_elems // LANES
    rem = num_elems - rows_full * LANES

    pos_num = jnp.float32(0.0)
    neg_num = jnp.float32(0.0)
    bce_pos_sum = jnp.float32(0.0)
    bce_neg_sum = jnp.float32(0.0)

    if rows_full > 0:
        # 128-aligned prefix, streamed through the kernel in native dtype.
        if rem:
            main_logits = logits[: rows_full * LANES].reshape(rows_full, LANES)
            main_target = target[: rows_full * LANES].reshape(rows_full, LANES)
        else:
            main_logits = logits.reshape(rows_full, LANES)   # free view
            main_target = target.reshape(rows_full, LANES)   # free view

        # Static tiling decisions (shapes are static under jit).
        block_rows = rows_full if rows_full <= block_rows_cap else block_rows_cap
        fold_rows = 8 if block_rows % 8 == 0 else 1
        num_blocks = -(-rows_full // block_rows)
        blocks_per_slice = -(-num_blocks // num_slices)
        valid_rows_last = rows_full - (num_blocks - 1) * block_rows
        needs_skip_guard = num_slices * blocks_per_slice > num_blocks

        def in_index_map(s, i):
            blk = s * blocks_per_slice + i
            # Clamp so the DMA always targets a valid block; the kernel skips
            # the (at most one) duplicated block via pl.when.
            return (jnp.minimum(blk, num_blocks - 1), 0)

        kernel = functools.partial(
            _boundary_loss_kernel,
            block_rows=block_rows, fold_rows=fold_rows,
            num_blocks=num_blocks, blocks_per_slice=blocks_per_slice,
            valid_rows_last=valid_rows_last, needs_skip_guard=needs_skip_guard)

        acc = pl.pallas_call(
            kernel,
            out_shape=jax.ShapeDtypeStruct((num_slices, 4, fold_rows, LANES),
                                           jnp.float32),
            grid_spec=pltpu.PrefetchScalarGridSpec(
                num_scalar_prefetch=0,
                grid=(num_slices, blocks_per_slice),
                in_specs=[
                    pl.BlockSpec((block_rows, LANES), in_index_map),
                    pl.BlockSpec((block_rows, LANES), in_index_map),
                ],
                out_specs=pl.BlockSpec((None, 4, fold_rows, LANES),
                                       lambda s, i: (s, 0, 0, 0)),
            ),
            compiler_params=pltpu.CompilerParams(
                dimension_semantics=("parallel", "arbitrary"),
                vmem_limit_bytes=32 * 1024 * 1024,
            ),
        )(main_logits, main_target)

        sums = jnp.sum(acc, axis=(0, 2, 3))  # (4,)
        pos_num += sums[0]
        neg_num += sums[1]
        bce_pos_sum += sums[2]
        bce_neg_sum += sums[3]

    if rem:
        # <=127-element tail handled in plain jnp (no full-array pad/copy of
        # both big inputs just to reach a lane multiple).
        tail_x = logits[rows_full * LANES:].astype(jnp.float32)
        tail_t_raw = target[rows_full * LANES:]
        tail_t = tail_t_raw.astype(jnp.float32)
        tpos = tail_t == 1.0
        tneg = tail_t == 0.0
        tail_bce = (jnp.maximum(tail_x, 0.0) - tail_x * tail_t
                    + jnp.log1p(jnp.exp(-jnp.abs(tail_x))))
        pos_num += jnp.sum(tpos.astype(jnp.float32))
        neg_num += jnp.sum(tneg.astype(jnp.float32))
        bce_pos_sum += jnp.sum(jnp.where(tpos, tail_bce, 0.0))
        bce_neg_sum += jnp.sum(jnp.where(tneg, tail_bce, 0.0))

    sum_num = pos_num + neg_num
    # weight[pos] = neg/sum, weight[neg] = pos/sum  (matches PyTorch: NaN if
    # sum_num == 0, same as the reference).
    weighted_sum = (neg_num * bce_pos_sum + pos_num * bce_neg_sum) / sum_num
    mean_loss = weighted_sum / jnp.float32(num_elems)
    return jnp.float32(coeff_bce) * mean_loss


def _reference_boundary_loss(bd_pre, bd_gt, coeff_bce=20.0):
    """Pure-JAX reference mirroring the PyTorch code (for a sanity check)."""
    log_p = jnp.transpose(bd_pre, (0, 2, 3, 1)).reshape(1, -1).astype(jnp.float32)
    target_t = bd_gt.reshape(1, -1).astype(jnp.float32)
    pos_index = target_t == 1.0
    neg_index = target_t == 0.0
    pos_num = jnp.sum(pos_index).astype(jnp.float32)
    neg_num = jnp.sum(neg_index).astype(jnp.float32)
    sum_num = pos_num + neg_num
    weight = jnp.where(pos_index, neg_num / sum_num,
                       jnp.where(neg_index, pos_num / sum_num, 0.0))
    bce = jnp.maximum(log_p, 0.0) - log_p * target_t + jnp.log1p(jnp.exp(-jnp.abs(log_p)))
    loss = jnp.mean(weight * bce)
    return coeff_bce * loss


if __name__ == "__main__":
    key = jax.random.PRNGKey(0)
    k1, k2, k3, k4, k5, k6 = jax.random.split(key, 6)

    # Case 1: lane-aligned boundary-head shapes (single full-extent block,
    # auto-detected num_slices).
    n, c, h, w = 2, 1, 16, 16
    bd_pre = jax.random.normal(k1, (n, c, h, w), dtype=jnp.float32)
    bd_gt = jax.random.bernoulli(k2, p=0.3, shape=(n, h, w)).astype(jnp.float32)
    loss = jax.block_until_ready(boundary_loss(bd_pre, bd_gt, coeff_bce=20.0))
    ref = _reference_boundary_loss(bd_pre, bd_gt, coeff_bce=20.0)
    assert jnp.allclose(loss, ref, rtol=1e-5, atol=1e-5), (loss, ref)

    # Case 2: ragged element count + tiny block cap + forced 2-slice grid to
    # exercise: the jnp tail path, the static last-block row mask, the fast
    # unmasked path, and the clamped/skipped trailing block.
    n2, c2, h2, w2 = 2, 1, 36, 36
    bd_pre2 = jax.random.normal(k3, (n2, c2, h2, w2), dtype=jnp.float32)
    bd_gt2 = jax.random.bernoulli(k4, p=0.4, shape=(n2, h2, w2)).astype(jnp.float32)
    loss2 = jax.block_until_ready(
        boundary_loss(bd_pre2, bd_gt2, coeff_bce=20.0, block_rows_cap=8,
                      num_slices=2))
    ref2 = _reference_boundary_loss(bd_pre2, bd_gt2, coeff_bce=20.0)
    assert jnp.allclose(loss2, ref2, rtol=1e-5, atol=1e-5), (loss2, ref2)

    # Case 3: row count a multiple of 8 (vreg-aligned fold path, single block).
    n3, c3, h3, w3 = 1, 1, 32, 32
    bd_pre3 = jax.random.normal(k5, (n3, c3, h3, w3), dtype=jnp.float32)
    bd_gt3 = jax.random.bernoulli(k6, p=0.2, shape=(n3, h3, w3)).astype(jnp.float32)
    loss3 = jax.block_until_ready(boundary_loss(bd_pre3, bd_gt3, coeff_bce=20.0))
    ref3 = _reference_boundary_loss(bd_pre3, bd_gt3, coeff_bce=20.0)
    assert jnp.allclose(loss3, ref3, rtol=1e-5, atol=1e-5), (loss3, ref3)

    print("KERNEL_OK")
</pallas_src>

<mosaic_0001>
module attributes {stable_mosaic.version = 11 : i64} {
  func.func @_boundary_loss_kernel(%arg0: i32, %arg1: i32, %arg2: memref<4x128xf32, #tpu.memory_space<vmem>>, %arg3: memref<4x128xf32, #tpu.memory_space<vmem>>, %arg4: memref<1x4x1x128xf32, #tpu.memory_space<vmem>>) attributes {dimension_semantics = [#tpu.dimension_semantics<parallel>, #tpu.dimension_semantics<arbitrary>], iteration_bounds = array<i64: 1, 1>, scalar_prefetch = 0 : i64, scratch_operands = 0 : i64, tpu.core_type = #tpu.core_type<tc>, window_params = [{transform_indices = @transform_0, window_bounds = array<i64: 4, 128>}, {transform_indices = @transform_1, window_bounds = array<i64: 4, 128>}, {transform_indices = @transform_2, window_bounds = array<i64: 1, 4, 1, 128>}]} {
    %c0_i32 = arith.constant 0 : i32
    %0 = arith.cmpi eq, %arg1, %c0_i32 : i32
    %1 = arith.extui %0 : i1 to i32
    %c0_i32_0 = arith.constant 0 : i32
    %2 = arith.cmpi ne, %1, %c0_i32_0 : i32
    scf.if %2 {
      %cst_42 = arith.constant 0.000000e+00 : f32
      %59 = vector.broadcast %cst_42 : f32 to vector<4x1x128xf32>
      %c0_43 = arith.constant 0 : index
      %c0_44 = arith.constant 0 : index
      %c0_45 = arith.constant 0 : index
      %c0_46 = arith.constant 0 : index
      %60 = vector.load %arg4[%c0_43, %c0_44, %c0_45, %c0_46] : memref<1x4x1x128xf32, #tpu.memory_space<vmem>>, vector<1x4x1x128xf32>
      %61 = vector.shape_cast %60 : vector<1x4x1x128xf32> to vector<4x1x128xf32>
      %62 = vector.shape_cast %59 : vector<4x1x128xf32> to vector<1x4x1x128xf32>
      tpu.vector_store %arg4[%c0_43, %c0_44, %c0_45, %c0_46], %62 {strides = array<i32>} : memref<1x4x1x128xf32, #tpu.memory_space<vmem>>, vector<1x4x1x128xf32>,
    } else {
    }
    %c0 = arith.constant 0 : index
    %c0_1 = arith.constant 0 : index
    %3 = vector.load %arg2[%c0, %c0_1] : memref<4x128xf32, #tpu.memory_space<vmem>>, vector<4x128xf32>
    %c0_2 = arith.constant 0 : index
    %c0_3 = arith.constant 0 : index
    %4 = vector.load %arg3[%c0_2, %c0_3] : memref<4x128xf32, #tpu.memory_space<vmem>>, vector<4x128xf32>
    %cst = arith.constant 1.000000e+00 : f32
    %5 = vector.broadcast %cst : f32 to vector<4x128xf32>
    %6 = arith.cmpf oeq, %4, %5 : vector<4x128xf32>
    %cst_4 = arith.constant 0.000000e+00 : f32
    %7 = vector.broadcast %cst_4 : f32 to vector<4x128xf32>
    %8 = arith.cmpf oeq, %4, %7 : vector<4x128xf32>
    %cst_5 = arith.constant 0.000000e+00 : f32
    %9 = vector.broadcast %cst_5 : f32 to vector<4x128xf32>
    %10 = arith.maximumf %3, %9 : vector<4x128xf32>
    %11 = arith.mulf %3, %4 : vector<4x128xf32>
    %12 = arith.subf %10, %11 : vector<4x128xf32>
    %13 = math.absf %3 : vector<4x128xf32>
    %cst_6 = arith.constant 0.000000e+00 : f32
    %14 = vector.broadcast %cst_6 : f32 to vector<4x128xf32>
    %15 = arith.subf %14, %13 : vector<4x128xf32>
    %16 = math.exp %15 : vector<4x128xf32>
    %17 = math.log1p %16 : vector<4x128xf32>
    %18 = arith.addf %12, %17 : vector<4x128xf32>
    %c0_7 = arith.constant 0 : index
    %c0_8 = arith.constant 0 : index
    %c0_9 = arith.constant 0 : index
    %c0_10 = arith.constant 0 : index
    %19 = vector.load %arg4[%c0_7, %c0_8, %c0_9, %c0_10] : memref<1x4x1x128xf32, #tpu.memory_space<vmem>>, vector<1x1x1x128xf32>
    %20 = vector.shape_cast %19 : vector<1x1x1x128xf32> to vector<1x128xf32>
    %21 = arith.extui %6 : vector<4x128xi1> to vector<4x128xi32>
    %22 = arith.sitofp %21 : vector<4x128xi32> to vector<4x128xf32>
    %cst_11 = arith.constant dense<0.000000e+00> : vector<128xf32>
    %23 = vector.multi_reduction <add>, %22, %cst_11 [0] : vector<4x128xf32> to vector<128xf32>
    %24 = vector.shape_cast %23 : vector<128xf32> to vector<1x128xf32>
    %25 = arith.addf %20, %24 : vector<1x128xf32>
    %c0_12 = arith.constant 0 : index
    %c0_13 = arith.constant 0 : index
    %c0_14 = arith.constant 0 : index
    %c0_15 = arith.constant 0 : index
    %26 = vector.load %arg4[%c0_12, %c0_13, %c0_14, %c0_15] : memref<1x4x1x128xf32, #tpu.memory_space<vmem>>, vector<1x1x1x128xf32>
    %27 = vector.shape_cast %26 : vector<1x1x1x128xf32> to vector<1x128xf32>
    %28 = vector.shape_cast %25 : vector<1x128xf32> to vector<1x1x1x128xf32>
    tpu.vector_store %arg4[%c0_12, %c0_13, %c0_14, %c0_15], %28 {strides = array<i32>} : memref<1x4x1x128xf32, #tpu.memory_space<vmem>>, vector<1x1x1x128xf32>,
    %c0_16 = arith.constant 0 : index
    %c1 = arith.constant 1 : index
    %c0_17 = arith.constant 0 : index
    %c0_18 = arith.constant 0 : index
    %29 = vector.load %arg4[%c0_16, %c1, %c0_17, %c0_18] : memref<1x4x1x128xf32, #tpu.memory_space<vmem>>, vector<1x1x1x128xf32>
    %30 = vector.shape_cast %29 : vector<1x1x1x128xf32> to vector<1x128xf32>
    %31 = arith.extui %8 : vector<4x128xi1> to vector<4x128xi32>
    %32 = arith.sitofp %31 : vector<4x128xi32> to vector<4x128xf32>
    %cst_19 = arith.constant dense<0.000000e+00> : vector<128xf32>
    %33 = vector.multi_reduction <add>, %32, %cst_19 [0] : vector<4x128xf32> to vector<128xf32>
    %34 = vector.shape_cast %33 : vector<128xf32> to vector<1x128xf32>
    %35 = arith.addf %30, %34 : vector<1x128xf32>
    %c0_20 = arith.constant 0 : index
    %c1_21 = arith.constant 1 : index
    %c0_22 = arith.constant 0 : index
    %c0_23 = arith.constant 0 : index
    %36 = vector.load %arg4[%c0_20, %c1_21, %c0_22, %c0_23] : memref<1x4x1x128xf32, #tpu.memory_space<vmem>>, vector<1x1x1x128xf32>
    %37 = vector.shape_cast %36 : vector<1x1x1x128xf32> to vector<1x128xf32>
    %38 = vector.shape_cast %35 : vector<1x128xf32> to vector<1x1x1x128xf32>
    tpu.vector_store %arg4[%c0_20, %c1_21, %c0_22, %c0_23], %38 {strides = array<i32>} : memref<1x4x1x128xf32, #tpu.memory_space<vmem>>, vector<1x1x1x128xf32>,
    %c0_24 = arith.constant 0 : index
    %c2 = arith.constant 2 : index
    %c0_25 = arith.constant 0 : index
    %c0_26 = arith.constant 0 : index
    %39 = vector.load %arg4[%c0_24, %c2, %c0_25, %c0_26] : memref<1x4x1x128xf32, #tpu.memory_space<vmem>>, vector<1x1x1x128xf32>
    %40 = vector.shape_cast %39 : vector<1x1x1x128xf32> to vector<1x128xf32>
    %cst_27 = arith.constant 0.000000e+00 : f32
    %41 = vector.broadcast %cst_27 : f32 to vector<4x128xf32>
    %42 = arith.select %6, %18, %41 : vector<4x128xi1>, vector<4x128xf32>
    %cst_28 = arith.constant dense<0.000000e+00> : vector<128xf32>
    %43 = vector.multi_reduction <add>, %42, %cst_28 [0] : vector<4x128xf32> to vector<128xf32>
    %44 = vector.shape_cast %43 : vector<128xf32> to vector<1x128xf32>
    %45 = arith.addf %40, %44 : vector<1x128xf32>
    %c0_29 = arith.constant 0 : index
    %c2_30 = arith.constant 2 : index
    %c0_31 = arith.constant 0 : index
    %c0_32 = arith.constant 0 : index
    %46 = vector.load %arg4[%c0_29, %c2_30, %c0_31, %c0_32] : memref<1x4x1x128xf32, #tpu.memory_space<vmem>>, vector<1x1x1x128xf32>
    %47 = vector.shape_cast %46 : vector<1x1x1x128xf32> to vector<1x128xf32>
    %48 = vector.shape_cast %45 : vector<1x128xf32> to vector<1x1x1x128xf32>
    tpu.vector_store %arg4[%c0_29, %c2_30, %c0_31, %c0_32], %48 {strides = array<i32>} : memref<1x4x1x128xf32, #tpu.memory_space<vmem>>, vector<1x1x1x128xf32>,
    %c0_33 = arith.constant 0 : index
    %c3 = arith.constant 3 : index
    %c0_34 = arith.constant 0 : index
    %c0_35 = arith.constant 0 : index
    %49 = vector.load %arg4[%c0_33, %c3, %c0_34, %c0_35] : memref<1x4x1x128xf32, #tpu.memory_space<vmem>>, vector<1x1x1x128xf32>
    %50 = vector.shape_cast %49 : vector<1x1x1x128xf32> to vector<1x128xf32>
    %cst_36 = arith.constant 0.000000e+00 : f32
    %51 = vector.broadcast %cst_36 : f32 to vector<4x128xf32>
    %52 = arith.select %8, %18, %51 : vector<4x128xi1>, vector<4x128xf32>
    %cst_37 = arith.constant dense<0.000000e+00> : vector<128xf32>
    %53 = vector.multi_reduction <add>, %52, %cst_37 [0] : vector<4x128xf32> to vector<128xf32>
    %54 = vector.shape_cast %53 : vector<128xf32> to vector<1x128xf32>
    %55 = arith.addf %50, %54 : vector<1x128xf32>
    %c0_38 = arith.constant 0 : index
    %c3_39 = arith.constant 3 : index
    %c0_40 = arith.constant 0 : index
    %c0_41 = arith.constant 0 : index
    %56 = vector.load %arg4[%c0_38, %c3_39, %c0_40, %c0_41] : memref<1x4x1x128xf32, #tpu.memory_space<vmem>>, vector<1x1x1x128xf32>
    %57 = vector.shape_cast %56 : vector<1x1x1x128xf32> to vector<1x128xf32>
    %58 = vector.shape_cast %55 : vector<1x128xf32> to vector<1x1x1x128xf32>
    tpu.vector_store %arg4[%c0_38, %c3_39, %c0_40, %c0_41], %58 {strides = array<i32>} : memref<1x4x1x128xf32, #tpu.memory_space<vmem>>, vector<1x1x1x128xf32>,
    return
  }
  func.func @transform_0(%arg0: i32, %arg1: i32) -> (i32, i32) {
    %c1_i32 = arith.constant 1 : i32
    %0 = arith.muli %arg0, %c1_i32 : i32
    %1 = arith.addi %0, %arg1 : i32
    %c0_i32 = arith.constant 0 : i32
    %2 = arith.minsi %1, %c0_i32 : i32
    %c0_i32_0 = arith.constant 0 : i32
    %c0_i32_1 = arith.constant 0 : i32
    return %2, %c0_i32_0 : i32, i32
  }
  func.func @transform_1(%arg0: i32, %arg1: i32) -> (i32, i32) {
    %c1_i32 = arith.constant 1 : i32
    %0 = arith.muli %arg0, %c1_i32 : i32
    %1 = arith.addi %0, %arg1 : i32
    %c0_i32 = arith.constant 0 : i32
    %2 = arith.minsi %1, %c0_i32 : i32
    %c0_i32_0 = arith.constant 0 : i32
    %c0_i32_1 = arith.constant 0 : i32
    return %2, %c0_i32_0 : i32, i32
  }
  func.func @transform_2(%arg0: i32, %arg1: i32) -> (i32, i32, i32, i32) {
    %c0_i32 = arith.constant 0 : i32
    %c0_i32_0 = arith.constant 0 : i32
    %c0_i32_1 = arith.constant 0 : i32
    %c0_i32_2 = arith.constant 0 : i32
    return %arg0, %c0_i32, %c0_i32_0, %c0_i32_1 : i32, i32, i32, i32
  }
}

</mosaic_0001>

<llo_original>
// kernel: boundary_loss.1
$region0: #{boundary_loss.1}
  #allocation0 [shape = 'u32[]', space=smem, size = 0x4, offset = 0x4, fixed_abs, tag = 'smem constant byte address 0x4 - core index']
  #allocation1 [shape = 'u32[144,128]{1,0:T(1,128)}', space=vmem, size = 0x12000, scoped, tag = 'internal scratch']
  %s0 = inlined_call_operand.vmem [shape: f32[4,128], index: 0, kind: input, shape index: {}]
  %s1 = inlined_call_operand.vmem [shape: f32[4,128], index: 1, kind: input, shape index: {}]
  %s2 = inlined_call_operand.vmem [shape: f32[1,4,1,128], index: 2, kind: output, shape index: {}]
  %s3 = sld [smem:[#allocation0]]
  $region22: #{boundary_loss.1} parent=0
    _
  %s5 = ssub.s32 1, %s3
  %s6 = scalar_select 0, %s5, %s3
  // Predicated region
  $region2: #{boundary_loss.1} parent=0 // pred_check
    _
  $region3: #{boundary_loss.1} parent=0 // pred_check_branch
    %8 = sbr.rel (0) target = $region5
  $region4: #{boundary_loss.1} parent=0 // pred_region
    %s9 = sadd.s32 0, 0
    %p10 = scmp.lt.s32.totalorder %s9, 0
    %s11 = scalar_select %p10, %s9, 0
    %p12 = scmp.lt.s32.totalorder %s11, 0
    %s13 = scalar_select %p12, %s11, 0
    %s14 = smul.addr %s13, 4
    %s15 = scalar_lea.vmem %s0, %s14
    %s16 = sadd.s32 0, 0
    %p17 = scmp.lt.s32.totalorder %s16, 0
    %s18 = scalar_select %p17, %s16, 0
  $region5: #{boundary_loss.1} parent=0 // pred_fallthru
    _
  // Predicated region
  $region6: #{boundary_loss.1} parent=0 // pred_check
    _
  $region7: #{boundary_loss.1} parent=0 // pred_check_branch
    %20 = sbr.rel (0) target = $region9
  $region8: #{boundary_loss.1} parent=0 // pred_region
    %s21 = sadd.s32 0, 0
    %p22 = scmp.lt.s32.totalorder %s21, 0
    %s23 = scalar_select %p22, %s21, 0
    %p24 = scmp.lt.s32.totalorder %s23, 0
    %s25 = scalar_select %p24, %s23, 0
    %s26 = smul.addr %s25, 4
    %s27 = scalar_lea.vmem %s1, %s26
    %s28 = sadd.s32 0, 0
    %p29 = scmp.lt.s32.totalorder %s28, 0
    %s30 = scalar_select %p29, %s28, 0
  $region9: #{boundary_loss.1} parent=0 // pred_fallthru
    _
  %s31 = sadd.s32 0, 0
  %p32 = scmp.lt.s32.totalorder %s31, 0
  %s33 = scalar_select %p32, %s31, 0
  %p34 = scmp.lt.s32.totalorder %s33, 0
  %s35 = scalar_select %p34, %s33, 0
  %s36 = smul.addr %s35, 4
  %s37 = scalar_lea.vmem %s0, %s36
  %s38 = sadd.s32 0, 0
  %p39 = scmp.lt.s32.totalorder %s38, 0
  %s40 = scalar_select %p39, %s38, 0
  %p41 = scmp.lt.s32.totalorder %s40, 0
  %s42 = scalar_select %p41, %s40, 0
  %s43 = smul.addr %s42, 4
  %s44 = scalar_lea.vmem %s1, %s43
  %s45 = sadd.s32 0, 0
  %p46 = scmp.lt.s32.totalorder %s45, 0
  %s47 = scalar_select %p46, %s45, 0
  %p48 = scmp.lt.s32.totalorder %s47, 0
  %s49 = scalar_select %p48, %s47, 0
  %s50 = smul.addr %s49, 4
  %s51 = scalar_lea.vmem %s0, %s50
  %s52 = sadd.s32 0, 0
  %p53 = scmp.lt.s32.totalorder %s52, 0
  %s54 = scalar_select %p53, %s52, 0
  %s55 = sadd.s32 0, 0
  %p56 = scmp.lt.s32.totalorder %s55, 0
  %s57 = scalar_select %p56, %s55, 0
  %p58 = scmp.lt.s32.totalorder %s57, 0
  %s59 = scalar_select %p58, %s57, 0
  %s60 = smul.addr %s59, 4
  %s61 = scalar_lea.vmem %s1, %s60
  %s62 = sadd.s32 0, 0
  %p63 = scmp.lt.s32.totalorder %s62, 0
  %s64 = scalar_select %p63, %s62, 0
  %p65 = scmp.eq.s32.totalorder 0, 0
  // Predicated region
  $region10: #{boundary_loss.1} parent=0 // pred_check
    %p66 = pneg %p65
  $region11: #{boundary_loss.1} parent=0 // pred_check_branch
    %68 = sbr.rel (%p66) target = $region13
  $region12: #{boundary_loss.1} parent=0 // pred_region
    %69 = vst [vmem:[%s2] sm:$0x1] 0.0
    %70 = vst [vmem:[%s2 + $0x1] sm:$0x1] 0.0
    %71 = vst [vmem:[%s2 + $0x2] sm:$0x1] 0.0
    %72 = vst [vmem:[%s2 + $0x3] sm:$0x1] 0.0
  $region13: #{boundary_loss.1} parent=0 // pred_fallthru
    _
  %v73 = vld [vmem:[%s51] sm:$0xf]
  %v74 = vld [vmem:[%s61] sm:$0xf]
  %vm75 = vcmp.eq.f32.partialorder %v74, 1.0
  %vm76 = vcmp.eq.f32.partialorder %v74, 0.0
  %v77 = vmax.f32 %v73, 0.0
  %v78 = vmul.f32 %v73, %v74
  %v79 = vsub.f32 %v77, %v78
  %v80 = vand.u32 2147483647, %v73
  %v81 = vsub.f32 0.0, %v80
  %v82 = vmul.f32 %v81, 1.442695
  %v83 = vpow.pop %v82
  %v84 = vadd.f32 %v83, 1.0
  %v85 = vlog2.pop %v84
  %v86 = vmul.f32 %v85, 0.6931472
  %v87 = vmul.f32 -0.5, %v83
  %v88 = vadd.f32 %v87, 1.0
  %v89 = vmul.f32 %v88, %v83
  %v90 = vand.u32 2147483647, %v83
  %vm91 = vcmp.lt.f32.partialorder %v90, 0.0004427343
  %v92 = vsel %vm91, %v89, %v86
  %v93 = vadd.f32 %v79, %v92
  %v94 = vld [vmem:[%s2] sm:$0x1]
  %v95 = vsel %vm75, 1, 0
  %v96 = vcvt.s32.f32 %v95
  %vm97 = vcmask 1043456
  %v98 = vsel %vm97, %v96, 0.0
  %v99 = vrot.slane %v98, 4
  %v100 = vadd.f32 %v98, %v99
  %v101 = vrot.slane %v100, 2
  %v102 = vadd.f32 %v100, %v101
  %v103 = vrot.slane %v102, 1
  %v104 = vadd.f32 %v102, %v103
  %v105 = vadd.f32 %v94, %v104
  %106 = vst [vmem:[%s2] sm:$0x1] %v105
  %s107 = scalar_lea.vmem %s2, 1
  %v108 = vld [vmem:[%s107] sm:$0x1]
  %v109 = vsel %vm76, 1, 0
  %v110 = vcvt.s32.f32 %v109
  %v111 = vsel %vm97, %v110, 0.0
  %v112 = vrot.slane %v111, 4
  %v113 = vadd.f32 %v111, %v112
  %v114 = vrot.slane %v113, 2
  %v115 = vadd.f32 %v113, %v114
  %v116 = vrot.slane %v115, 1
  %v117 = vadd.f32 %v115, %v116
  %v118 = vadd.f32 %v108, %v117
  %119 = vst [vmem:[%s107] sm:$0x1] %v118
  %s120 = scalar_lea.vmem %s2, 2
  %v121 = vld [vmem:[%s120] sm:$0x1]
  %v122 = vsel %vm75, %v93, 0.0
  %v123 = vsel %vm97, %v122, 0.0
  %v124 = vrot.slane %v123, 4
  %v125 = vadd.f32 %v123, %v124
  %v126 = vrot.slane %v125, 2
  %v127 = vadd.f32 %v125, %v126
  %v128 = vrot.slane %v127, 1
  %v129 = vadd.f32 %v127, %v128
  %v130 = vadd.f32 %v121, %v129
  %131 = vst [vmem:[%s120] sm:$0x1] %v130
  %s132 = scalar_lea.vmem %s2, 3
  %v133 = vld [vmem:[%s132] sm:$0x1]
  %v134 = vsel %vm76, %v93, 0.0
  %v135 = vsel %vm97, %v134, 0.0
  %v136 = vrot.slane %v135, 4
  %v137 = vadd.f32 %v135, %v136
  %v138 = vrot.slane %v137, 2
  %v139 = vadd.f32 %v137, %v138
  %v140 = vrot.slane %v139, 1
  %v141 = vadd.f32 %v139, %v140
  %v142 = vadd.f32 %v133, %v141
  %143 = vst [vmem:[%s132] sm:$0x1] %v142
  // Predicated region
  $region14: #{boundary_loss.1} parent=0 // pred_check
    _
  $region15: #{boundary_loss.1} parent=0 // pred_check_branch
    %145 = sbr.rel (0) target = $region17
  $region16: #{boundary_loss.1} parent=0 // pred_region
    _
  $region17: #{boundary_loss.1} parent=0 // pred_fallthru
    _
  // Predicated region
  $region18: #{boundary_loss.1} parent=0 // pred_check
    _
  $region19: #{boundary_loss.1} parent=0 // pred_check_branch
    %147 = sbr.rel (0) target = $region21
  $region20: #{boundary_loss.1} parent=0 // pred_region
    _
  $region21: #{boundary_loss.1} parent=0 // pred_fallthru
    _

</llo_original>
